<compile_context>
chip_gen: v5e
topology: v5e:2x2
jax: 0.10.0
libtpu: 0.0.40
codegen_flags: <defaults>
</compile_context>

<pallas_src>
import functools

import jax
import jax.numpy as jnp
from jax import lax
from jax.experimental import pallas as pl
from jax.experimental.pallas import tpu as pltpu

_MIB = 1024 * 1024


# ---------------------------------------------------------------------------
# Tiling / VMEM policy helpers
# ---------------------------------------------------------------------------
def _round_up(x, m):
    return ((x + m - 1) // m) * m


def _pick_tile_128(L, cap):
    """Largest multiple-of-128 tile <= cap that divides L, else None."""
    for t in range((cap // 128) * 128, 127, -128):
        if L % t == 0:
            return t
    return None


def _plan_axis(L, cap):
    """Plan (padded_length, tile) for a token axis that lands on vreg lanes."""
    if L <= cap:
        return L, L                        # single full-extent tile, no padding
    t = _pick_tile_128(L, cap)
    if t is not None:
        return L, t
    Lp = _round_up(L, 128)                 # pad; 128 always divides Lp
    return Lp, _pick_tile_128(Lp, cap)


def _vmem_physical_bytes():
    try:
        return int(pltpu.get_tpu_info().vmem_capacity_bytes)
    except Exception:
        return 64 * _MIB                   # conservative (v7x per-TensorCore)


def _mosaic_params(dimension_semantics, est_bytes, vmem_phys):
    # Always set the limit explicitly (v5e's scoped default is only 16 MiB) but
    # never request the full physical VMEM (v7x only has 64 MiB per core).
    cap = (vmem_phys * 3) // 4
    limit = int(min(cap, max(2 * est_bytes, 32 * _MIB)))
    return pltpu.CompilerParams(dimension_semantics=dimension_semantics,
                                vmem_limit_bytes=limit)


# ---------------------------------------------------------------------------
# Projection kernel:  y_cf = W @ x_cf + b   (channel-first in / out, bf16 out)
# ---------------------------------------------------------------------------
def _proj_kernel(x_ref, w_ref, b_ref, o_ref):
    x = x_ref[...].astype(w_ref.dtype)                       # bf16 MXU operand
    y = jnp.dot(w_ref[...], x, preferred_element_type=jnp.float32)
    o_ref[...] = (y + b_ref[...]).astype(o_ref.dtype)        # bf16 stream out


def _project(x, w_bf16, b_f32, vmem_phys, *, tile_cap=512):
    """x: (B, D, L) channel-first; w_bf16: (Di, D); b_f32: (Di,).
    Returns the channel-first projection (B, Di, L) in bfloat16."""
    B, D, L = x.shape
    Di = w_bf16.shape[0]
    if L <= tile_cap:
        tl = L
    else:
        tl = _pick_tile_128(L, tile_cap) or L

    est = 2 * (D * tl * x.dtype.itemsize + Di * tl * 2) + Di * D * 2 + Di * 4
    return pl.pallas_call(
        _proj_kernel,
        out_shape=jax.ShapeDtypeStruct((B, Di, L), jnp.bfloat16),
        grid_spec=pltpu.PrefetchScalarGridSpec(
            num_scalar_prefetch=0,
            grid=(B, L // tl),
            in_specs=[
                pl.BlockSpec((pl.Squeezed(), D, tl), lambda b, l: (b, 0, l)),
                pl.BlockSpec((Di, D), lambda b, l: (0, 0)),
                pl.BlockSpec((Di, 1), lambda b, l: (0, 0)),
            ],
            out_specs=pl.BlockSpec((pl.Squeezed(), Di, tl), lambda b, l: (b, 0, l)),
        ),
        compiler_params=_mosaic_params(("parallel", "parallel"), est, vmem_phys),
    )(x, w_bf16, b_f32.reshape(Di, 1))


# ---------------------------------------------------------------------------
# Flash attention kernel (online softmax over Lk tiles, channel-first output,
# accumulation directly in the f32 output block)
# ---------------------------------------------------------------------------
def _flash_kernel(qp_ref, kp_ref, v_ref, o_ref, m_sc, l_sc, *,
                  tk, lk_valid, mask_k):
    ki = pl.program_id(2)

    @pl.when(ki == 0)
    def _init():
        m_sc[...] = jnp.full_like(m_sc, -jnp.inf)
        l_sc[...] = jnp.zeros_like(l_sc)
        o_ref[...] = jnp.zeros_like(o_ref)

    # sT[k, q] == sims[q, k]; transposed-LHS contraction keeps kp lane-dense
    # (no wrapper transpose of kp, no lane-sparse (tk, Di) tiles).
    sT = lax.dot_general(kp_ref[...], qp_ref[...],
                         dimension_numbers=(((0,), (0,)), ((), ())),
                         preferred_element_type=jnp.float32)          # (tk, tq)
    if mask_k:
        rows = ki * tk + lax.broadcasted_iota(jnp.int32, (tk, 1), 0)
        sT = jnp.where(rows < lk_valid, sT, -jnp.inf)                 # padded k

    m_prev = m_sc[...]                                                # (1, tq)
    m_new = jnp.maximum(m_prev, jnp.max(sT, axis=0, keepdims=True))   # (1, tq)
    alpha = jnp.exp(m_prev - m_new)                                   # (1, tq)
    pT = jnp.exp(sT - m_new)                                          # (tk, tq)
    l_sc[...] = alpha * l_sc[...] + jnp.sum(pT, axis=0, keepdims=True)
    o_ref[...] = alpha * o_ref[...] + jnp.dot(
        v_ref[...], pT.astype(v_ref.dtype),
        preferred_element_type=jnp.float32)                           # (D, tq)
    m_sc[...] = m_new

    @pl.when(ki == pl.num_programs(2) - 1)
    def _finalize():
        o_ref[...] = o_ref[...] * pl.reciprocal(l_sc[...], approx=True)


def multi_head_cross_attention(q, k, v, params, *, tq_cap=None, tk_cap=None):
    """q, k, v: (B, d_model, L) float32, channel-first (PyTorch layout).
    Returns (B, d_model, Lq) float32, matching the torch module's forward."""
    wq, bq, wk, bk = params["wq"], params["bq"], params["wk"], params["bk"]
    B, D, Lq = q.shape
    _, _, Lk = k.shape
    Di = wq.shape[0]
    scale = 1.0 / (float(Di) ** 0.5)

    vmem_phys = _vmem_physical_bytes()
    if tq_cap is None:
        tq_cap = 1024 if vmem_phys >= 96 * _MIB else 512   # v5e/v6e vs v7x
    if tk_cap is None:
        tk_cap = 512

    Lq_p, tq = _plan_axis(Lq, tq_cap)
    Lk_p, tk = _plan_axis(Lk, tk_cap)

    # v7x shards the parallel grid axes over 2 TensorCores; keep >= 2 blocks
    # when a 128-aligned split exists (no-op on v5e/v6e single-core chips).
    if B * (Lq_p // tq) < 2:
        t2 = _pick_tile_128(Lq_p, max(128, Lq_p // 2))
        if t2 is not None:
            tq = t2

    # Pad token axes to the planned (128-aligned) lengths; padded k columns are
    # masked to -inf inside the kernel, padded q columns are sliced off below.
    if Lq_p != Lq:
        q = jnp.pad(q, ((0, 0), (0, 0), (0, Lq_p - Lq)))
    if Lk_p != Lk:
        k = jnp.pad(k, ((0, 0), (0, 0), (0, Lk_p - Lk)))
        v = jnp.pad(v, ((0, 0), (0, 0), (0, Lk_p - Lk)))

    # Fold the 1/sqrt(Di) softmax scale into the q projection (bias too).
    wq_bf = (wq * scale).astype(jnp.bfloat16)
    bq_f = (bq * scale).astype(jnp.float32)
    wk_bf = wk.astype(jnp.bfloat16)
    bk_f = bk.astype(jnp.float32)

    # Projections hoisted out of the attention loop; bf16 channel-first streams.
    qp = _project(q, wq_bf, bq_f, vmem_phys)        # (B, Di, Lq_p) bf16
    kp = _project(k, wk_bf, bk_f, vmem_phys)        # (B, Di, Lk_p) bf16
    v_bf = v.astype(jnp.bfloat16)                   # halve re-streamed v bytes

    grid = (B, Lq_p // tq, Lk_p // tk)
    kernel = functools.partial(_flash_kernel, tk=tk, lk_valid=Lk,
                               mask_k=(Lk_p != Lk))

    # Per-step VMEM footprint: double-buffered bf16 inputs + f32 output block
    # (the accumulator) + m/l scratch + sT/pT f32 temporaries.
    est = (2 * 2 * (Di * tq + Di * tk + D * tk)
           + 2 * 4 * D * tq
           + 4 * 4 * tq
           + 2 * 4 * tk * tq)

    out = pl.pallas_call(
        kernel,
        out_shape=jax.ShapeDtypeStruct((B, D, Lq_p), jnp.float32),
        grid_spec=pltpu.PrefetchScalarGridSpec(
            num_scalar_prefetch=0,
            grid=grid,
            in_specs=[
                pl.BlockSpec((pl.Squeezed(), Di, tq), lambda b, qi, ki: (b, 0, qi)),
                pl.BlockSpec((pl.Squeezed(), Di, tk), lambda b, qi, ki: (b, 0, ki)),
                pl.BlockSpec((pl.Squeezed(), D, tk), lambda b, qi, ki: (b, 0, ki)),
            ],
            out_specs=pl.BlockSpec((pl.Squeezed(), D, tq),
                                   lambda b, qi, ki: (b, 0, qi)),
            scratch_shapes=[
                pltpu.VMEM((1, tq), jnp.float32),   # running max  m
                pltpu.VMEM((1, tq), jnp.float32),   # running sum  l
            ],
        ),
        compiler_params=_mosaic_params(("parallel", "parallel", "arbitrary"),
                                       est, vmem_phys),
    )(qp, kp, v_bf)

    return out[:, :, :Lq] if Lq_p != Lq else out


def init_params(key, d_model):
    """Deterministic nn.Linear-style init; weights stored in torch layout
    (out_features, in_features). wv exists in the torch module but is unused
    by forward, so it is omitted here."""
    inner_d = d_model // 8
    kq, kqb, kk, kkb = jax.random.split(key, 4)
    bound = 1.0 / (d_model ** 0.5)
    wq = jax.random.uniform(kq, (inner_d, d_model), jnp.float32, -bound, bound)
    bq = jax.random.uniform(kqb, (inner_d,), jnp.float32, -bound, bound)
    wk = jax.random.uniform(kk, (inner_d, d_model), jnp.float32, -bound, bound)
    bk = jax.random.uniform(kkb, (inner_d,), jnp.float32, -bound, bound)
    return {"wq": wq, "bq": bq, "wk": wk, "bk": bk}


def _reference(q, k, v, params):
    """Pure-JAX f32 reference mirroring the torch forward exactly."""
    inner_d = params["wq"].shape[0]
    q_t = jnp.transpose(q, (0, 2, 1))
    k_t = jnp.transpose(k, (0, 2, 1))
    v_t = jnp.transpose(v, (0, 2, 1))
    qp = q_t @ params["wq"].T + params["bq"]
    kp = k_t @ params["wk"].T + params["bk"]
    sims = jnp.einsum("bqd,bkd->bqk", qp, kp) / (inner_d ** 0.5)
    attn = jax.nn.softmax(sims, axis=-1)
    out = jnp.einsum("bqk,bkd->bqd", attn, v_t)
    return jnp.transpose(out, (0, 2, 1))


if __name__ == "__main__":
    d_model = 32
    num_heads = 4          # d_model % num_heads == 0; forward never uses heads
    batch, Lq, Lk = 2, 16, 16

    key = jax.random.PRNGKey(0)
    kp_, kq_, kk_, kv_ = jax.random.split(key, 4)
    params = init_params(kp_, d_model)

    # inputs in PyTorch channel-first layout: (B, d_model, L)
    q = jax.random.normal(kq_, (batch, d_model, Lq), jnp.float32)
    k = jax.random.normal(kk_, (batch, d_model, Lk), jnp.float32)
    v = jax.random.normal(kv_, (batch, d_model, Lk), jnp.float32)

    out = multi_head_cross_attention(q, k, v, params)
    out = jax.block_until_ready(out)

    ref = _reference(q, k, v, params)
    assert out.shape == (batch, d_model, Lq)
    # bf16 streams + approx reciprocal => relaxed tolerance vs f32 reference
    assert jnp.allclose(out, ref, atol=5e-2, rtol=5e-2), \
        float(jnp.max(jnp.abs(out - ref)))

    print("KERNEL_OK")
</pallas_src>

<mosaic_0001>
module attributes {stable_mosaic.version = 11 : i64} {
  func.func @_proj_kernel(%arg0: i32, %arg1: i32, %arg2: memref<1x32x16xf32, #tpu.memory_space<vmem>>, %arg3: memref<4x32xbf16, #tpu.memory_space<vmem>>, %arg4: memref<4x1xf32, #tpu.memory_space<vmem>>, %arg5: memref<1x4x16xbf16, #tpu.memory_space<vmem>>) attributes {dimension_semantics = [#tpu.dimension_semantics<parallel>, #tpu.dimension_semantics<parallel>], iteration_bounds = array<i64: 2, 1>, scalar_prefetch = 0 : i64, scratch_operands = 0 : i64, tpu.core_type = #tpu.core_type<tc>, window_params = [{transform_indices = @transform_0, window_bounds = array<i64: 1, 32, 16>}, {pipeline_mode = #tpu.pipeline_mode<synchronous>, transform_indices = @transform_1, window_bounds = array<i64: 4, 32>}, {pipeline_mode = #tpu.pipeline_mode<synchronous>, transform_indices = @transform_2, window_bounds = array<i64: 4, 1>}, {transform_indices = @transform_3, window_bounds = array<i64: 1, 4, 16>}]} {
    %c0 = arith.constant 0 : index
    %c0_0 = arith.constant 0 : index
    %c0_1 = arith.constant 0 : index
    %0 = vector.load %arg2[%c0, %c0_0, %c0_1] : memref<1x32x16xf32, #tpu.memory_space<vmem>>, vector<1x32x16xf32>
    %1 = vector.shape_cast %0 : vector<1x32x16xf32> to vector<32x16xf32>
    %2 = arith.truncf %1 : vector<32x16xf32> to vector<32x16xbf16>
    %c0_2 = arith.constant 0 : index
    %c0_3 = arith.constant 0 : index
    %3 = vector.load %arg3[%c0_2, %c0_3] : memref<4x32xbf16, #tpu.memory_space<vmem>>, vector<4x32xbf16>
    %cst = arith.constant dense<0.000000e+00> : vector<4x16xf32>
    %4 = tpu.matmul %3, %2, %cst {dimension_numbers = #tpu.dot_dimension_numbers<[1], [0], [0], [1], [0, 0, 1, 1], [], []>} : vector<4x32xbf16>, vector<32x16xbf16>, vector<4x16xf32> -> vector<4x16xf32>
    %c0_4 = arith.constant 0 : index
    %c0_5 = arith.constant 0 : index
    %5 = vector.load %arg4[%c0_4, %c0_5] : memref<4x1xf32, #tpu.memory_space<vmem>>, vector<4x1xf32>
    %6 = vector.broadcast %5 : vector<4x1xf32> to vector<4x16xf32>
    %7 = arith.addf %4, %6 : vector<4x16xf32>
    %8 = arith.truncf %7 : vector<4x16xf32> to vector<4x16xbf16>
    %c0_6 = arith.constant 0 : index
    %c0_7 = arith.constant 0 : index
    %c0_8 = arith.constant 0 : index
    %9 = vector.load %arg5[%c0_6, %c0_7, %c0_8] : memref<1x4x16xbf16, #tpu.memory_space<vmem>>, vector<1x4x16xbf16>
    %10 = vector.shape_cast %9 : vector<1x4x16xbf16> to vector<4x16xbf16>
    %11 = vector.shape_cast %8 : vector<4x16xbf16> to vector<1x4x16xbf16>
    tpu.vector_store %arg5[%c0_6, %c0_7, %c0_8], %11 {strides = array<i32>} : memref<1x4x16xbf16, #tpu.memory_space<vmem>>, vector<1x4x16xbf16>,
    return
  }
  func.func @transform_0(%arg0: i32, %arg1: i32) -> (i32, i32, i32) {
    %c0_i32 = arith.constant 0 : i32
    %c0_i32_0 = arith.constant 0 : i32
    return %arg0, %c0_i32, %arg1 : i32, i32, i32
  }
  func.func @transform_1(%arg0: i32, %arg1: i32) -> (i32, i32) {
    %c0_i32 = arith.constant 0 : i32
    %c0_i32_0 = arith.constant 0 : i32
    %c0_i32_1 = arith.constant 0 : i32
    return %c0_i32, %c0_i32_0 : i32, i32
  }
  func.func @transform_2(%arg0: i32, %arg1: i32) -> (i32, i32) {
    %c0_i32 = arith.constant 0 : i32
    %c0_i32_0 = arith.constant 0 : i32
    %c0_i32_1 = arith.constant 0 : i32
    return %c0_i32, %c0_i32_0 : i32, i32
  }
  func.func @transform_3(%arg0: i32, %arg1: i32) -> (i32, i32, i32) {
    %c0_i32 = arith.constant 0 : i32
    %c0_i32_0 = arith.constant 0 : i32
    return %arg0, %c0_i32, %arg1 : i32, i32, i32
  }
}

</mosaic_0001>

<llo_original>
// kernel: tpu_custom_call.1
$region0: #{tpu_custom_call.1}
  #allocation0 [shape = 'u32[]', space=smem, size = 0x4, offset = 0x4, fixed_abs, tag = 'smem constant byte address 0x4 - core index']
  #allocation1 [shape = 'u32[72,128]{1,0:T(1,128)}', space=vmem, size = 0x9000, scoped, tag = 'internal scratch']
  %s0 = inlined_call_operand.vmem [shape: f32[2,32,16], index: 0, kind: input, shape index: {}]
  %s1 = inlined_call_operand.vmem [shape: bf16[4,32], index: 1, kind: input, shape index: {}]
  %s2 = inlined_call_operand.vmem [shape: f32[4,1], index: 2, kind: input, shape index: {}]
  %s3 = inlined_call_operand.hbm [shape: bf16[2,4,16], index: 3, kind: output, shape index: {}]
  %s4 = sld [smem:[#allocation0]]
  $region45: #{tpu_custom_call.1} parent=0
    _
  %s6 = ssub.s32 1, %s4
  %s7 = scalar_select 0, %s6, %s4
  $region1: #{tpu_custom_call.1} parent=0
    #allocation2 [shape = 'u8[2048]{0}', space=vmem, size = 0x800, scoped, tag = 'output window, operand 0']
    #allocation3 [shape = 's32[2]{0}', space=sflag, size = 0x8, scoped, tag = 'scoped memory for tpu_custom_call.1']
    %8 = vsyncpa [#allocation3], 0
    %s9 = scalar_lea.sflag [#allocation3], 1
    %10 = vsyncpa %s9, 0
    loop: start=0, step=1, limit=4
    $region2: #{tpu_custom_call.1} parent=1 // loop_pre_header
      _
    $region3: #{tpu_custom_call.1} parent=1 // loop_header
      %s12 = sphi 0, %s16
      %p13 = scmp.ge.s32.totalorder %s12, 4
      %s19 = sphi 0, %s31
      %s20 = sphi 0, %s27
      %s21 = sphi 0, %s19
      %s22 = sphi 0, %s20
      %s23 = sphi 0, %s21
      %s24 = sphi 0, %s22
      %s36 = sphi 0, %s38
      %s39 = sphi 0, %s36
      %s40 = sphi 0, %s39
      %s56 = sphi 0, %s40
      %s60 = sphi 0, %s60
      %s62 = sphi 0, %s60
      %s63 = sphi 0, %s62
      %s77 = sphi 0, %s63
      %s81 = sphi 0, %s81
      %s83 = sphi 0, %s81
      %s84 = sphi 0, %s83
      %s98 = sphi 0, %s84
      %s106 = sphi 0, %s108
      %s109 = sphi 0, %s106
      %s110 = sphi 0, %s109
      %s126 = sphi 0, %s110
    $region4: #{tpu_custom_call.1} parent=1 // loop_header_branch
      %15 = sbr.rel (%p13) target = $region8
    $region5: #{tpu_custom_call.1} parent=1 // loop_body
      %s17 = ssub.s32 %s12, 1
      %s18 = ssub.s32 %s12, 2
      %s25 = sadd.s32 1, %s20
      %p26 = scmp.ge.s32.totalorder %s25, 1
      %s27 = scalar_select %p26, 0, %s25
      %s28 = sadd.s32 1, %s19
      %s29 = scalar_select %p26, %s28, %s19
      %p30 = scmp.ge.s32.totalorder %s29, 2
      %s31 = scalar_select %p30, 0, %s29
      %s32 = ssub.s32 %s19, %s31
      %s33 = ssub.s32 %s20, %s27
      %s34 = sor.u32 %s32, %s33
      %p35 = scmp.eq.s32.totalorder %s34, 0
      %s37 = sadd.s32 %s36, 1
      %s38 = scalar_select %p35, %s36, %s37
      %p41 = pneg %p35
      %p42 = scmp.eq.s32.totalorder %s12, 1
      %p43 = por %p41, %p42
      %p44 = scmp.ne.s32.totalorder %s36, %s39
      %p45 = scmp.eq.s32.totalorder %s12, 0
      %p46 = por %p44, %p45
      %p47 = scmp.ne.s32.totalorder %s36, %s39
      %p48 = scmp.eq.s32.totalorder %s17, 1
      %p49 = por %p47, %p48
      %p50 = scmp.ne.s32.totalorder %s39, %s40
      %p51 = scmp.eq.s32.totalorder %s17, 0
      %p52 = por %p50, %p51
      %p53 = scmp.ne.s32.totalorder %s39, %s40
      %p54 = scmp.eq.s32.totalorder %s18, 1
      %p55 = por %p53, %p54
      %p57 = scmp.ne.s32.totalorder %s40, %s56
      %p58 = scmp.eq.s32.totalorder %s18, 0
      %p59 = por %p57, %p58
      %s61 = sadd.s32 %s60, 1
      %p64 = scmp.eq.s32.totalorder %s12, 1
      %p65 = scmp.ne.s32.totalorder %s60, %s62
      %p66 = scmp.eq.s32.totalorder %s12, 0
      %p67 = por %p65, %p66
      %p68 = scmp.ne.s32.totalorder %s60, %s62
      %p69 = scmp.eq.s32.totalorder %s17, 1
      %p70 = por %p68, %p69
      %p71 = scmp.ne.s32.totalorder %s62, %s63
      %p72 = scmp.eq.s32.totalorder %s17, 0
      %p73 = por %p71, %p72
      %p74 = scmp.ne.s32.totalorder %s62, %s63
      %p75 = scmp.eq.s32.totalorder %s18, 1
      %p76 = por %p74, %p75
      %p78 = scmp.ne.s32.totalorder %s63, %s77
      %p79 = scmp.eq.s32.totalorder %s18, 0
      %p80 = por %p78, %p79
      %s82 = sadd.s32 %s81, 1
      %p85 = scmp.eq.s32.totalorder %s12, 1
      %p86 = scmp.ne.s32.totalorder %s81, %s83
      %p87 = scmp.eq.s32.totalorder %s12, 0
      %p88 = por %p86, %p87
      %p89 = scmp.ne.s32.totalorder %s81, %s83
      %p90 = scmp.eq.s32.totalorder %s17, 1
      %p91 = por %p89, %p90
      %p92 = scmp.ne.s32.totalorder %s83, %s84
      %p93 = scmp.eq.s32.totalorder %s17, 0
      %p94 = por %p92, %p93
      %p95 = scmp.ne.s32.totalorder %s83, %s84
      %p96 = scmp.eq.s32.totalorder %s18, 1
      %p97 = por %p95, %p96
      %p99 = scmp.ne.s32.totalorder %s84, %s98
      %p100 = scmp.eq.s32.totalorder %s18, 0
      %p101 = por %p99, %p100
      %s102 = ssub.s32 %s19, %s31
      %s103 = ssub.s32 %s20, %s27
      %s104 = sor.u32 %s102, %s103
      %p105 = scmp.eq.s32.totalorder %s104, 0
      %s107 = sadd.s32 %s106, 1
      %s108 = scalar_select %p105, %s106, %s107
      %p111 = pneg %p105
      %p112 = scmp.eq.s32.totalorder %s12, 1
      %p113 = por %p111, %p112
      %p114 = scmp.ne.s32.totalorder %s106, %s109
      %p115 = scmp.eq.s32.totalorder %s12, 0
      %p116 = por %p114, %p115
      %p117 = scmp.ne.s32.totalorder %s106, %s109
      %p118 = scmp.eq.s32.totalorder %s17, 1
      %p119 = por %p117, %p118
      %p120 = scmp.ne.s32.totalorder %s109, %s110
      %p121 = scmp.eq.s32.totalorder %s17, 0
      %p122 = por %p120, %p121
      %p123 = scmp.ne.s32.totalorder %s109, %s110
      %p124 = scmp.eq.s32.totalorder %s18, 1
      %p125 = por %p123, %p124
      %p127 = scmp.ne.s32.totalorder %s110, %s126
      %p128 = scmp.eq.s32.totalorder %s18, 0
      %p129 = por %p127, %p128
      %p130 = scmp.le.s32.totalorder 1, %s12
      %p131 = scmp.lt.s32.totalorder %s12, 3
      %p132 = pnand %p130, %p131
      %p133 = pneg %p132
      // Predicated region
      $region9: #{tpu_custom_call.1} parent=5 // pred_check
        _
      $region10: #{tpu_custom_call.1} parent=5 // pred_check_branch
        %135 = sbr.rel (%p132) target = $region12
      $region11: #{tpu_custom_call.1} parent=5 // pred_region
        %s136 = ssub.s32 %s12, 1
        // Predicated region
        $region13: #{tpu_custom_call.1} parent=11 // pred_check
          %p137 = pneg %p73
        $region14: #{tpu_custom_call.1} parent=11 // pred_check_branch
          %139 = sbr.rel (%p137) target = $region16
        $region15: #{tpu_custom_call.1} parent=11 // pred_region
          _
        $region16: #{tpu_custom_call.1} parent=11 // pred_fallthru
          _
        // Predicated region
        $region17: #{tpu_custom_call.1} parent=11 // pred_check
          %p140 = pneg %p94
        $region18: #{tpu_custom_call.1} parent=11 // pred_check_branch
          %142 = sbr.rel (%p140) target = $region20
        $region19: #{tpu_custom_call.1} parent=11 // pred_region
          _
        $region20: #{tpu_custom_call.1} parent=11 // pred_fallthru
          _
      $region12: #{tpu_custom_call.1} parent=5 // pred_fallthru
        _
      %p143 = scmp.lt.s32.totalorder %s12, 2
      // Predicated region
      $region21: #{tpu_custom_call.1} parent=5 // pred_check
        %p144 = pneg %p143
      $region22: #{tpu_custom_call.1} parent=5 // pred_check_branch
        %146 = sbr.rel (%p144) target = $region24
      $region23: #{tpu_custom_call.1} parent=5 // pred_region
        // Predicated region
        $region25: #{tpu_custom_call.1} parent=23 // pred_check
          %p147 = pneg %p46
        $region26: #{tpu_custom_call.1} parent=23 // pred_check_branch
          %149 = sbr.rel (%p147) target = $region28
        $region27: #{tpu_custom_call.1} parent=23 // pred_region
          %p150 = scmp.lt.s32.totalorder %s19, 1
          %s151 = scalar_select %p150, %s19, 1
          %p152 = scmp.lt.s32.totalorder %s20, 0
          %s153 = scalar_select %p152, %s20, 0
          %s154 = smul.addr %s151, 4
          %s155 = sadd.s32 %s153, %s154
          %s156 = smul.addr %s155, 8
          %s157 = scalar_lea.vmem %s0, %s156
        $region28: #{tpu_custom_call.1} parent=23 // pred_fallthru
          _
      $region24: #{tpu_custom_call.1} parent=5 // pred_fallthru
        _
      %p158 = scmp.le.s32.totalorder 1, %s12
      %p159 = scmp.lt.s32.totalorder %s12, 3
      %p160 = pnand %p158, %p159
      %p161 = pneg %p160
      // Predicated region
      $region29: #{tpu_custom_call.1} parent=5 // pred_check
        _
      $region30: #{tpu_custom_call.1} parent=5 // pred_check_branch
        %163 = sbr.rel (%p160) target = $region32
      $region31: #{tpu_custom_call.1} parent=5 // pred_region
        %s164 = ssub.s32 %s12, 1
        %p165 = scmp.lt.s32.totalorder %s21, 1
        %s166 = scalar_select %p165, %s21, 1
        %p167 = scmp.lt.s32.totalorder %s22, 0
        %s168 = scalar_select %p167, %s22, 0
        %s169 = smul.addr %s166, 4
        %s170 = sadd.s32 %s168, %s169
        %s171 = smul.addr %s170, 8
        %s172 = scalar_lea.vmem %s0, %s171
        %p173 = pneg %p52
        %p174 = pneg %p49
        %p175 = pneg %p73
        %p176 = pneg %p70
        %p177 = pneg %p94
        %p178 = pneg %p91
        %p179 = pneg %p122
        %p180 = pneg %p119
        %s181 = sand.u32 %s109, 1
        %s182 = scalar_lea.sflag [#allocation3], %s181
        %s183 = sand.u32 %s109, 1
        %s184 = smul.addr %s183, 2
        %s185 = scalar_lea.vmem [#allocation2], %s184
        %p186 = scmp.lt.s32.totalorder %s21, 1
        %s187 = scalar_select %p186, %s21, 1
        %p188 = scmp.lt.s32.totalorder %s22, 0
        %s189 = scalar_select %p188, %s22, 0
        %s190 = smul.addr %s187, 4
        %s191 = sadd.s32 %s189, %s190
        %s192 = smul.addr %s191, 8
        %s193 = scalar_lea.vmem %s0, %s192
        %v195 = vld [vmem:[%s193] sm:$0xff]
        %v196 = vld [vmem:[%s193 + $0x8] sm:$0xff]
        %v197 = vld [vmem:[%s193 + $0x10] sm:$0xff]
        %v198 = vld [vmem:[%s193 + $0x18] sm:$0xff]
        %v199 = vpack.c.bf16 %v196, %v195
        %v200 = vpack.c.bf16 %v198, %v197
        %v201 = vld [vmem:[%s1] sm:$0x3]
        %v202 = vld [vmem:[%s2] sm:$0xf]
        %204 = vset.pattern.permute.xlu0 0
        %205 = vperm.xlu0 %204, %v202
        %v206 = vpop.permute.xlu0 %205
        %vm208 = vcmask 261120
        %v210 = vsel %vm208, %v201, 0
        %212 = vmatpush.bf16.msra.mxu0 0
        %213 = vmatpush.bf16.msra.mxu0 0
        %214 = vmatpush.bf16.msra.mxu0 0
        %215 = vmatpush.bf16.msra.mxu0 0
        %216 = vmatpush.bf16.msra.mxu0 0
        %217 = vmatpush.bf16.msra.mxu0 0
        %218 = vmatpush.bf16.msra.mxu0 %v200
        %219 = vmatpush.bf16.msra.mxu0 %v199
        %220 = vmatmul.bf16.gmra.mxu0 %v210
        %v221 = vpop.f32.mrf.mxu0
        %v222 = vadd.f32 %v206, %v221
        %v223 = vpop.f32.mrf.mxu0
        %224 = vdwg.mxu0
        %v225 = vpack.c.bf16 %v222, %v222
        %vm226 = vcmask 123904
        %227 = vst.msk [vmem:[%s185] sm:$0x3] %vm226, %v225
        %s228 = sand.u32 %s109, 1
        %s229 = scalar_lea.sflag [#allocation3], %s228
        %s230 = sand.u32 %s109, 1
        %s231 = smul.addr %s230, 2
        %s232 = scalar_lea.vmem [#allocation2], %s231
        // Predicated region
        $region33: #{tpu_custom_call.1} parent=31 // pred_check
          %p233 = pneg %p119
        $region34: #{tpu_custom_call.1} parent=31 // pred_check_branch
          %235 = sbr.rel (%p233) target = $region36
        $region35: #{tpu_custom_call.1} parent=31 // pred_region
          %237 = vsyncadd %s229, 0
          %s238 = sadd.s32 %s22, %s21
          %s239 = smul.addr %s238, 2
          %s240 = scalar_lea.hbm %s3, %s239
          %s242 = sshll.u32 %s232, 4
          %s243 = int_to_ptr.vmem [resolvable:$true] %s242
          %s244 = sshll.u32 %s240, 4
          %s245 = int_to_ptr.hbm [resolvable:$true] %s244
          %247 = dma.vmem_to_hbm [thread:$0]  %s243, 32, %s245, %s229
        $region36: #{tpu_custom_call.1} parent=31 // pred_fallthru
          _
      $region32: #{tpu_custom_call.1} parent=5 // pred_fallthru
        _
      %p248 = scmp.le.s32.totalorder 2, %s12
      // Predicated region
      $region37: #{tpu_custom_call.1} parent=5 // pred_check
        %p249 = pneg %p248
      $region38: #{tpu_custom_call.1} parent=5 // pred_check_branch
        %251 = sbr.rel (%p249) target = $region40
      $region39: #{tpu_custom_call.1} parent=5 // pred_region
        %s252 = ssub.s32 %s12, 2
        // Predicated region
        $region41: #{tpu_custom_call.1} parent=39 // pred_check
          %p253 = pneg %p125
        $region42: #{tpu_custom_call.1} parent=39 // pred_check_branch
          %255 = sbr.rel (%p253) target = $region44
        $region43: #{tpu_custom_call.1} parent=39 // pred_region
          %s256 = sand.u32 %s110, 1
          %s257 = scalar_lea.sflag [#allocation3], %s256
          %s258 = sand.u32 %s110, 1
          %s259 = smul.addr %s258, 2
          %s260 = scalar_lea.vmem [#allocation2], %s259
          %262 = dma.done %s257, 32
        $region44: #{tpu_custom_call.1} parent=39 // pred_fallthru
          _
      $region40: #{tpu_custom_call.1} parent=5 // pred_fallthru
        _
    $region6: #{tpu_custom_call.1} parent=1 // loop_footer
      %s16 = sadd.s32 1, %s12
    $region7: #{tpu_custom_call.1} parent=1 // loop_footer_branch
      %11 = sbr.rel target = $region3
    $region8: #{tpu_custom_call.1} parent=1 // loop_exit
      _
    %263 = vsyncpa [#allocation3], 1
    %s264 = scalar_lea.sflag [#allocation3], 1
    %265 = vsyncpa %s264, 1

</llo_original>
